<compile_context>
chip_gen: v7x
topology: tpu7x:2x2x1
jax: 0.10.0
libtpu: 0.0.40
codegen_flags: <defaults>
</compile_context>

<pallas_src>
import functools

import jax
import jax.numpy as jnp
from jax.experimental import pallas as pl
from jax.experimental.pallas import tpu as pltpu

_EPS = 1e-12  # guards div-by-zero in l2-normalize (PyTorch code has no eps; effect < 1e-9)


def _triplet_fusion_kernel(x_ref, w1_ref, b1_ref, wh_ref, bh_ref, wc_ref, bc_ref,
                           emb_ref, clf_ref, *, epad):
    """Single step: shared hidden layer, fused global|local head, classifier head."""
    # Shared hidden layer: one MXU dot for all three (padded) branches.
    h = jnp.dot(x_ref[...], w1_ref[...], preferred_element_type=jnp.float32)
    h = jnp.maximum(h + b1_ref[...], 0.0)                       # (MPAD, HPAD) f32
    h16 = h.astype(jnp.bfloat16)

    # Fused heads: gl[:, :epad] is the global feature, gl[:, epad:] the local feature.
    gl = jnp.dot(h16, wh_ref[...], preferred_element_type=jnp.float32) + bh_ref[...]

    # L2 normalize the global feature (padded lanes are exactly zero -> norm unchanged).
    g = gl[:, :epad]                                             # aligned 128-lane slice
    sumsq = jnp.sum(g * g, axis=1, keepdims=True)
    emb_ref[...] = (g * jax.lax.rsqrt(sumsq + _EPS)).astype(emb_ref.dtype)

    # Classifier: gl IS the [global | local] concatenation (zero rows of Wc under the
    # padded lanes). Computed for every padded row; the wrapper keeps only x1's rows.
    logits = jnp.dot(gl.astype(jnp.bfloat16), wc_ref[...],
                     preferred_element_type=jnp.float32) + bc_ref[...]
    clf_ref[...] = logits.astype(clf_ref.dtype)


def triplet_fusion_forward(x1, x2, x3, padded_params, embed_dim, n_classes):
    """Returns (out1_g, out2_g, out3_g, out4) like TripletNet_fusion.forward."""
    w1, b1, wh, bh, wc, bc = padded_params
    B = x1.shape[0]
    D, HPAD = w1.shape
    GLPAD = wh.shape[1]            # 2 * EPAD (global | local, each lane-padded to 128)
    EPAD = GLPAD // 2
    CPAD = wc.shape[1]

    # Stack the three branches into one sublane-padded bf16 slab in the wrapper
    # (tiny XLA copy; avoids an expensive in-kernel sublane concat of 2-row blocks).
    MPAD = ((3 * B + 7) // 8) * 8
    x = jnp.concatenate([x1.reshape(B, -1), x2.reshape(B, -1), x3.reshape(B, -1)],
                        axis=0).astype(jnp.bfloat16)
    x = jnp.pad(x, ((0, MPAD - 3 * B), (0, 0)))                  # (MPAD, D) bf16

    flops = 2 * (MPAD * D * HPAD + MPAD * HPAD * GLPAD + MPAD * GLPAD * CPAD)
    bytes_accessed = (MPAD * D * 2                                        # input bf16
                      + (D * HPAD + HPAD * GLPAD + GLPAD * CPAD) * 2      # bf16 weights
                      + (HPAD + GLPAD + CPAD) * 4                         # f32 biases
                      + (MPAD * EPAD + MPAD * CPAD) * 4)                  # f32 outputs

    kernel = functools.partial(_triplet_fusion_kernel, epad=EPAD)

    emb, logits = pl.pallas_call(
        kernel,
        out_shape=(jax.ShapeDtypeStruct((MPAD, EPAD), jnp.float32),
                   jax.ShapeDtypeStruct((MPAD, CPAD), jnp.float32)),
        grid_spec=pltpu.PrefetchScalarGridSpec(
            num_scalar_prefetch=0,
            grid=(1,),  # single step: branches folded into M, weights loaded once
            in_specs=[
                pl.BlockSpec((MPAD, D), lambda i: (0, 0)),     # stacked inputs (bf16)
                pl.BlockSpec(w1.shape, lambda i: (0, 0)),      # W1  (bf16, HID padded)
                pl.BlockSpec(b1.shape, lambda i: (0, 0)),      # b1  (f32)
                pl.BlockSpec(wh.shape, lambda i: (0, 0)),      # [Wg | Wl] fused head
                pl.BlockSpec(bh.shape, lambda i: (0, 0)),      # [bg | bl]
                pl.BlockSpec(wc.shape, lambda i: (0, 0)),      # Wc  (bf16, 256 x CPAD)
                pl.BlockSpec(bc.shape, lambda i: (0, 0)),      # bc
            ],
            out_specs=(
                pl.BlockSpec((MPAD, EPAD), lambda i: (0, 0)),  # normalized embeddings
                pl.BlockSpec((MPAD, CPAD), lambda i: (0, 0)),  # classifier logits
            ),
        ),
        compiler_params=pltpu.CompilerParams(
            dimension_semantics=("arbitrary",)),
        cost_estimate=pl.CostEstimate(flops=flops,
                                      transcendentals=MPAD,
                                      bytes_accessed=bytes_accessed),
    )(x, w1, b1, wh, bh, wc, bc)

    out1 = emb[0 * B:1 * B, :embed_dim]
    out2 = emb[1 * B:2 * B, :embed_dim]
    out3 = emb[2 * B:3 * B, :embed_dim]
    out4 = logits[:B, :n_classes]
    return out1, out2, out3, out4


def make_core_params(key, in_features, hidden, embed_dim, local_dim, n_classes):
    """Logical (unpadded) f32 parameters of the stand-in embedding/clf net."""
    k1, k2, k3, k4, k5, k6, k7, k8 = jax.random.split(key, 8)
    s = 0.02
    w1 = jax.random.normal(k1, (in_features, hidden), jnp.float32) * s
    b1 = jax.random.normal(k2, (1, hidden), jnp.float32) * s
    wg = jax.random.normal(k3, (hidden, embed_dim), jnp.float32) * s
    bg = jax.random.normal(k4, (1, embed_dim), jnp.float32) * s
    wl = jax.random.normal(k5, (hidden, local_dim), jnp.float32) * s
    bl = jax.random.normal(k6, (1, local_dim), jnp.float32) * s
    wc = jax.random.normal(k7, (embed_dim + local_dim, n_classes), jnp.float32) * s
    bc = jax.random.normal(k8, (1, n_classes), jnp.float32) * s
    return (w1, b1, wg, bg, wl, bl, wc, bc)


def pad_params_for_kernel(core, *, hpad=128, epad=128, lpad=128, cpad=128):
    """Kernel layout: bf16 matmul operands, f32 biases, zero-padded so every lane /
    sublane group is full. Padding never changes the math (zero cols/rows/biases)."""
    w1, b1, wg, bg, wl, bl, wc, bc = core
    d, hidden = w1.shape
    embed = wg.shape[1]
    local = wl.shape[1]
    n_cls = wc.shape[1]

    w1p = jnp.zeros((d, hpad), jnp.float32).at[:, :hidden].set(w1).astype(jnp.bfloat16)
    b1p = jnp.zeros((1, hpad), jnp.float32).at[:, :hidden].set(b1)

    # Fused head [Wg | Wl], each padded to 128 lanes; padded hidden rows are zero.
    whp = jnp.zeros((hpad, epad + lpad), jnp.float32)
    whp = whp.at[:hidden, :embed].set(wg)
    whp = whp.at[:hidden, epad:epad + local].set(wl)
    whp = whp.astype(jnp.bfloat16)
    bhp = jnp.zeros((1, epad + lpad), jnp.float32)
    bhp = bhp.at[:, :embed].set(bg).at[:, epad:epad + local].set(bl)

    # Classifier rows laid out to match the fused-head lane layout.
    wcp = jnp.zeros((epad + lpad, cpad), jnp.float32)
    wcp = wcp.at[:embed, :n_cls].set(wc[:embed])
    wcp = wcp.at[epad:epad + local, :n_cls].set(wc[embed:])
    wcp = wcp.astype(jnp.bfloat16)
    bcp = jnp.zeros((1, cpad), jnp.float32).at[:, :n_cls].set(bc)

    return (w1p, b1p, whp, bhp, wcp, bcp)


def _reference(x1, x2, x3, core, embed_dim, n_classes):
    """Pure-JAX reference with identical bf16-operand / f32-accumulate math."""
    w1, b1, wg, bg, wl, bl, wc, bc = core
    w1b, wgb, wlb, wcb = (w.astype(jnp.bfloat16) for w in (w1, wg, wl, wc))

    def hidden(x):
        xf = x.reshape(x.shape[0], -1).astype(jnp.bfloat16)
        return jnp.maximum(
            jnp.dot(xf, w1b, preferred_element_type=jnp.float32) + b1, 0.0)

    def global_feat(h):
        return jnp.dot(h.astype(jnp.bfloat16), wgb,
                       preferred_element_type=jnp.float32) + bg

    def l2norm(f):
        return f * jax.lax.rsqrt(jnp.sum(f * f, axis=1, keepdims=True) + _EPS)

    h1, h2, h3 = hidden(x1), hidden(x2), hidden(x3)
    g1, g2, g3 = global_feat(h1), global_feat(h2), global_feat(h3)
    l1 = jnp.dot(h1.astype(jnp.bfloat16), wlb,
                 preferred_element_type=jnp.float32) + bl
    fused = jnp.concatenate([g1, l1], axis=1).astype(jnp.bfloat16)
    logits = jnp.dot(fused, wcb, preferred_element_type=jnp.float32) + bc
    return (l2norm(g1)[:, :embed_dim], l2norm(g2)[:, :embed_dim],
            l2norm(g3)[:, :embed_dim], logits[:, :n_classes])


if __name__ == "__main__":
    B, C, H, W = 2, 4, 16, 16            # NCHW like the PyTorch inputs
    HIDDEN, EMBED, LOCAL, N_CLASSES = 64, 32, 32, 2
    D = C * H * W

    key = jax.random.PRNGKey(0)
    kx1, kx2, kx3, kp = jax.random.split(key, 4)
    x1 = jax.random.normal(kx1, (B, C, H, W), jnp.float32)
    x2 = jax.random.normal(kx2, (B, C, H, W), jnp.float32)
    x3 = jax.random.normal(kx3, (B, C, H, W), jnp.float32)

    core = make_core_params(kp, D, HIDDEN, EMBED, LOCAL, N_CLASSES)
    padded = pad_params_for_kernel(core)

    out1, out2, out3, out4 = triplet_fusion_forward(x1, x2, x3, padded,
                                                    EMBED, N_CLASSES)
    (out1, out2, out3, out4) = jax.block_until_ready((out1, out2, out3, out4))

    r1, r2, r3, r4 = _reference(x1, x2, x3, core, EMBED, N_CLASSES)

    assert out1.shape == (B, EMBED) and out2.shape == (B, EMBED)
    assert out3.shape == (B, EMBED) and out4.shape == (B, N_CLASSES)
    assert jnp.allclose(out1, r1, atol=1e-3, rtol=1e-3)
    assert jnp.allclose(out2, r2, atol=1e-3, rtol=1e-3)
    assert jnp.allclose(out3, r3, atol=1e-3, rtol=1e-3)
    assert jnp.allclose(out4, r4, atol=1e-3, rtol=1e-3)
    # l2-normalized embeddings must have unit norm.
    assert jnp.allclose(jnp.sum(out1 * out1, axis=1), 1.0, atol=1e-3)
    assert jnp.allclose(jnp.sum(out2 * out2, axis=1), 1.0, atol=1e-3)
    assert jnp.allclose(jnp.sum(out3 * out3, axis=1), 1.0, atol=1e-3)

    print("KERNEL_OK")
</pallas_src>

<mosaic_0001>
module attributes {stable_mosaic.version = 11 : i64} {
  func.func @_triplet_fusion_kernel(%arg0: i32, %arg1: memref<8x1024xbf16, #tpu.memory_space<vmem>>, %arg2: memref<1024x128xbf16, #tpu.memory_space<vmem>>, %arg3: memref<1x128xf32, #tpu.memory_space<vmem>>, %arg4: memref<128x256xbf16, #tpu.memory_space<vmem>>, %arg5: memref<1x256xf32, #tpu.memory_space<vmem>>, %arg6: memref<256x128xbf16, #tpu.memory_space<vmem>>, %arg7: memref<1x128xf32, #tpu.memory_space<vmem>>, %arg8: memref<8x128xf32, #tpu.memory_space<vmem>>, %arg9: memref<8x128xf32, #tpu.memory_space<vmem>>) attributes {dimension_semantics = [#tpu.dimension_semantics<arbitrary>], iteration_bounds = array<i64: 1>, scalar_prefetch = 0 : i64, scratch_operands = 0 : i64, tpu.core_type = #tpu.core_type<tc>, window_params = [{pipeline_mode = #tpu.pipeline_mode<synchronous>, transform_indices = @transform_0, window_bounds = array<i64: 8, 1024>}, {pipeline_mode = #tpu.pipeline_mode<synchronous>, transform_indices = @transform_1, window_bounds = array<i64: 1024, 128>}, {pipeline_mode = #tpu.pipeline_mode<synchronous>, transform_indices = @transform_2, window_bounds = array<i64: 1, 128>}, {pipeline_mode = #tpu.pipeline_mode<synchronous>, transform_indices = @transform_3, window_bounds = array<i64: 128, 256>}, {pipeline_mode = #tpu.pipeline_mode<synchronous>, transform_indices = @transform_4, window_bounds = array<i64: 1, 256>}, {pipeline_mode = #tpu.pipeline_mode<synchronous>, transform_indices = @transform_5, window_bounds = array<i64: 256, 128>}, {pipeline_mode = #tpu.pipeline_mode<synchronous>, transform_indices = @transform_6, window_bounds = array<i64: 1, 128>}, {pipeline_mode = #tpu.pipeline_mode<synchronous>, transform_indices = @transform_7, window_bounds = array<i64: 8, 128>}, {pipeline_mode = #tpu.pipeline_mode<synchronous>, transform_indices = @transform_8, window_bounds = array<i64: 8, 128>}]} {
    %c0 = arith.constant 0 : index
    %c0_0 = arith.constant 0 : index
    %0 = vector.load %arg1[%c0, %c0_0] : memref<8x1024xbf16, #tpu.memory_space<vmem>>, vector<8x1024xbf16>
    %c0_1 = arith.constant 0 : index
    %c0_2 = arith.constant 0 : index
    %1 = vector.load %arg2[%c0_1, %c0_2] : memref<1024x128xbf16, #tpu.memory_space<vmem>>, vector<1024x128xbf16>
    %cst = arith.constant dense<0.000000e+00> : vector<8x128xf32>
    %2 = tpu.matmul %0, %1, %cst {dimension_numbers = #tpu.dot_dimension_numbers<[1], [0], [0], [1], [0, 0, 1, 1], [], []>} : vector<8x1024xbf16>, vector<1024x128xbf16>, vector<8x128xf32> -> vector<8x128xf32>
    %c0_3 = arith.constant 0 : index
    %c0_4 = arith.constant 0 : index
    %3 = vector.load %arg3[%c0_3, %c0_4] : memref<1x128xf32, #tpu.memory_space<vmem>>, vector<1x128xf32>
    %4 = vector.broadcast %3 : vector<1x128xf32> to vector<8x128xf32>
    %5 = arith.addf %2, %4 : vector<8x128xf32>
    %cst_5 = arith.constant 0.000000e+00 : f32
    %6 = vector.broadcast %cst_5 : f32 to vector<8x128xf32>
    %7 = arith.maximumf %5, %6 : vector<8x128xf32>
    %8 = arith.truncf %7 : vector<8x128xf32> to vector<8x128xbf16>
    %c0_6 = arith.constant 0 : index
    %c0_7 = arith.constant 0 : index
    %9 = vector.load %arg4[%c0_6, %c0_7] : memref<128x256xbf16, #tpu.memory_space<vmem>>, vector<128x256xbf16>
    %cst_8 = arith.constant dense<0.000000e+00> : vector<8x256xf32>
    %10 = tpu.matmul %8, %9, %cst_8 {dimension_numbers = #tpu.dot_dimension_numbers<[1], [0], [0], [1], [0, 0, 1, 1], [], []>} : vector<8x128xbf16>, vector<128x256xbf16>, vector<8x256xf32> -> vector<8x256xf32>
    %c0_9 = arith.constant 0 : index
    %c0_10 = arith.constant 0 : index
    %11 = vector.load %arg5[%c0_9, %c0_10] : memref<1x256xf32, #tpu.memory_space<vmem>>, vector<1x256xf32>
    %12 = vector.broadcast %11 : vector<1x256xf32> to vector<8x256xf32>
    %13 = arith.addf %10, %12 : vector<8x256xf32>
    %14 = vector.extract_strided_slice %13 {offsets = [0, 0], sizes = [8, 128], strides = [1, 1]} : vector<8x256xf32> to vector<8x128xf32>
    %15 = arith.mulf %14, %14 : vector<8x128xf32>
    %cst_11 = arith.constant dense<0.000000e+00> : vector<8xf32>
    %16 = vector.multi_reduction <add>, %15, %cst_11 [1] : vector<8x128xf32> to vector<8xf32>
    %17 = vector.shape_cast %16 : vector<8xf32> to vector<8x1xf32>
    %cst_12 = arith.constant 9.99999996E-13 : f32
    %18 = vector.broadcast %cst_12 : f32 to vector<8x1xf32>
    %19 = arith.addf %17, %18 : vector<8x1xf32>
    %20 = math.rsqrt %19 : vector<8x1xf32>
    %21 = vector.broadcast %20 : vector<8x1xf32> to vector<8x128xf32>
    %22 = arith.mulf %14, %21 : vector<8x128xf32>
    %c0_13 = arith.constant 0 : index
    %c0_14 = arith.constant 0 : index
    %23 = vector.load %arg8[%c0_13, %c0_14] : memref<8x128xf32, #tpu.memory_space<vmem>>, vector<8x128xf32>
    tpu.vector_store %arg8[%c0_13, %c0_14], %22 {strides = array<i32>} : memref<8x128xf32, #tpu.memory_space<vmem>>, vector<8x128xf32>,
    %24 = arith.truncf %13 : vector<8x256xf32> to vector<8x256xbf16>
    %c0_15 = arith.constant 0 : index
    %c0_16 = arith.constant 0 : index
    %25 = vector.load %arg6[%c0_15, %c0_16] : memref<256x128xbf16, #tpu.memory_space<vmem>>, vector<256x128xbf16>
    %cst_17 = arith.constant dense<0.000000e+00> : vector<8x128xf32>
    %26 = tpu.matmul %24, %25, %cst_17 {dimension_numbers = #tpu.dot_dimension_numbers<[1], [0], [0], [1], [0, 0, 1, 1], [], []>} : vector<8x256xbf16>, vector<256x128xbf16>, vector<8x128xf32> -> vector<8x128xf32>
    %c0_18 = arith.constant 0 : index
    %c0_19 = arith.constant 0 : index
    %27 = vector.load %arg7[%c0_18, %c0_19] : memref<1x128xf32, #tpu.memory_space<vmem>>, vector<1x128xf32>
    %28 = vector.broadcast %27 : vector<1x128xf32> to vector<8x128xf32>
    %29 = arith.addf %26, %28 : vector<8x128xf32>
    %c0_20 = arith.constant 0 : index
    %c0_21 = arith.constant 0 : index
    %30 = vector.load %arg9[%c0_20, %c0_21] : memref<8x128xf32, #tpu.memory_space<vmem>>, vector<8x128xf32>
    tpu.vector_store %arg9[%c0_20, %c0_21], %29 {strides = array<i32>} : memref<8x128xf32, #tpu.memory_space<vmem>>, vector<8x128xf32>,
    return
  }
  func.func @transform_0(%arg0: i32) -> (i32, i32) {
    %c0_i32 = arith.constant 0 : i32
    %c0_i32_0 = arith.constant 0 : i32
    %c0_i32_1 = arith.constant 0 : i32
    return %c0_i32, %c0_i32_0 : i32, i32
  }
  func.func @transform_1(%arg0: i32) -> (i32, i32) {
    %c0_i32 = arith.constant 0 : i32
    %c0_i32_0 = arith.constant 0 : i32
    %c0_i32_1 = arith.constant 0 : i32
    return %c0_i32, %c0_i32_0 : i32, i32
  }
  func.func @transform_2(%arg0: i32) -> (i32, i32) {
    %c0_i32 = arith.constant 0 : i32
    %c0_i32_0 = arith.constant 0 : i32
    %c0_i32_1 = arith.constant 0 : i32
    return %c0_i32, %c0_i32_0 : i32, i32
  }
  func.func @transform_3(%arg0: i32) -> (i32, i32) {
    %c0_i32 = arith.constant 0 : i32
    %c0_i32_0 = arith.constant 0 : i32
    %c0_i32_1 = arith.constant 0 : i32
    return %c0_i32, %c0_i32_0 : i32, i32
  }
  func.func @transform_4(%arg0: i32) -> (i32, i32) {
    %c0_i32 = arith.constant 0 : i32
    %c0_i32_0 = arith.constant 0 : i32
    %c0_i32_1 = arith.constant 0 : i32
    return %c0_i32, %c0_i32_0 : i32, i32
  }
  func.func @transform_5(%arg0: i32) -> (i32, i32) {
    %c0_i32 = arith.constant 0 : i32
    %c0_i32_0 = arith.constant 0 : i32
    %c0_i32_1 = arith.constant 0 : i32
    return %c0_i32, %c0_i32_0 : i32, i32
  }
  func.func @transform_6(%arg0: i32) -> (i32, i32) {
    %c0_i32 = arith.constant 0 : i32
    %c0_i32_0 = arith.constant 0 : i32
    %c0_i32_1 = arith.constant 0 : i32
    return %c0_i32, %c0_i32_0 : i32, i32
  }
  func.func @transform_7(%arg0: i32) -> (i32, i32) {
    %c0_i32 = arith.constant 0 : i32
    %c0_i32_0 = arith.constant 0 : i32
    %c0_i32_1 = arith.constant 0 : i32
    return %c0_i32, %c0_i32_0 : i32, i32
  }
  func.func @transform_8(%arg0: i32) -> (i32, i32) {
    %c0_i32 = arith.constant 0 : i32
    %c0_i32_0 = arith.constant 0 : i32
    %c0_i32_1 = arith.constant 0 : i32
    return %c0_i32, %c0_i32_0 : i32, i32
  }
}

</mosaic_0001>

<llo_original>
// kernel: tpu_custom_call.1
$region0: #{tpu_custom_call.1}
  #allocation0 [shape = 'u32[]', space=smem, size = 0x4, offset = 0x4, fixed_abs, tag = 'smem constant byte address 0x4 - core index']
  #allocation1 [shape = 'u32[144,128]{1,0:T(1,128)}', space=vmem, size = 0x12000, scoped, tag = 'internal scratch']
  %s0 = inlined_call_operand.hbm [shape: bf16[8,1024], index: 0, kind: input, shape index: {}]
  %s1 = inlined_call_operand.hbm [shape: bf16[1024,128], index: 1, kind: input, shape index: {}]
  %s2 = inlined_call_operand.vmem [shape: f32[1,128], index: 2, kind: input, shape index: {}]
  %s3 = inlined_call_operand.hbm [shape: bf16[128,256], index: 3, kind: input, shape index: {}]
  %s4 = inlined_call_operand.vmem [shape: f32[1,256], index: 4, kind: input, shape index: {}]
  %s5 = inlined_call_operand.hbm [shape: bf16[256,128], index: 5, kind: input, shape index: {}]
  %s6 = inlined_call_operand.vmem [shape: f32[1,128], index: 6, kind: input, shape index: {}]
  %s7 = inlined_call_operand.hbm [shape: f32[8,128], index: 7, kind: output, shape index: {0}]
  %s8 = inlined_call_operand.hbm [shape: f32[8,128], index: 8, kind: output, shape index: {1}]
  %9 = xla_tuple %s7, %s8
  %s10 = sld [smem:[#allocation0]]
  $region62: #{tpu_custom_call.1} parent=0
    _
  %s12 = ssub.s32 1, %s10
  %s13 = scalar_select 0, %s12, %s10
  $region1: #{tpu_custom_call.1} parent=0
    #allocation2 [shape = 'u8[16384]{0}', space=vmem, size = 0x4000, scoped, tag = 'input window, operand 0, single buffered']
    #allocation3 [shape = 's32[1]{0}', space=sflag, size = 0x4, scoped, tag = 'scoped memory for tpu_custom_call.1']
    #allocation4 [shape = 's32[1]{0}', space=sflag, size = 0x4, scoped, tag = 'scoped memory for tpu_custom_call.1']
    #allocation5 [shape = 'u8[262144]{0}', space=vmem, size = 0x40000, scoped, tag = 'input window, operand 1, single buffered']
    #allocation6 [shape = 's32[1]{0}', space=sflag, size = 0x4, scoped, tag = 'scoped memory for tpu_custom_call.1']
    #allocation7 [shape = 'u8[65536]{0}', space=vmem, size = 0x10000, scoped, tag = 'input window, operand 3, single buffered']
    #allocation8 [shape = 'u8[65536]{0}', space=vmem, size = 0x10000, scoped, tag = 'input window, operand 5, single buffered']
    #allocation9 [shape = 's32[1]{0}', space=sflag, size = 0x4, scoped, tag = 'scoped memory for tpu_custom_call.1']
    #allocation10 [shape = 'u8[4096]{0}', space=vmem, size = 0x1000, scoped, tag = 'output window, operand 0, single buffered']
    #allocation11 [shape = 'u8[4096]{0}', space=vmem, size = 0x1000, scoped, tag = 'output window, operand 1, single buffered']
    #allocation12 [shape = 's32[1]{0}', space=sflag, size = 0x4, scoped, tag = 'scoped memory for tpu_custom_call.1']
    %14 = vsyncpa [#allocation3], 0
    %15 = vsyncpa [#allocation6], 0
    %16 = vsyncpa [#allocation9], 0
    %17 = vsyncpa [#allocation4], 0
    %18 = vsyncpa [#allocation12], 0
    // Predicated region
    $region2: #{tpu_custom_call.1} parent=1 // pred_check
      _
    $region3: #{tpu_custom_call.1} parent=1 // pred_check_branch
      %20 = sbr.rel (0) target = $region5
    $region4: #{tpu_custom_call.1} parent=1 // pred_region
      %s22 = ssub.s32 512, 512
      %23 = vsyncadd [#allocation3], %s22
      %s25 = sshll.u32 [#allocation2], 4
      %s26 = int_to_ptr.vmem [resolvable:$true] %s25
      %28 = dma.hbm_to_vmem [thread:$0]  %s0, 512, %s26, [#allocation3]
    $region5: #{tpu_custom_call.1} parent=1 // pred_fallthru
      _
    // Predicated region
    $region6: #{tpu_custom_call.1} parent=1 // pred_check
      _
    $region7: #{tpu_custom_call.1} parent=1 // pred_check_branch
      %30 = sbr.rel (0) target = $region9
    $region8: #{tpu_custom_call.1} parent=1 // pred_region
      %s32 = ssub.s32 8192, 8192
      %33 = vsyncadd [#allocation6], %s32
      %s34 = sshll.u32 [#allocation5], 4
      %s35 = int_to_ptr.vmem [resolvable:$true] %s34
      %40 = dma.hbm_to_vmem [thread:$0]  %s1, 8192, %s35, [#allocation6], 64, 64, 4
    $region9: #{tpu_custom_call.1} parent=1 // pred_fallthru
      _
    // Predicated region
    $region10: #{tpu_custom_call.1} parent=1 // pred_check
      _
    $region11: #{tpu_custom_call.1} parent=1 // pred_check_branch
      %42 = sbr.rel (0) target = $region13
    $region12: #{tpu_custom_call.1} parent=1 // pred_region
      _
    $region13: #{tpu_custom_call.1} parent=1 // pred_fallthru
      _
    // Predicated region
    $region14: #{tpu_custom_call.1} parent=1 // pred_check
      _
    $region15: #{tpu_custom_call.1} parent=1 // pred_check_branch
      %44 = sbr.rel (0) target = $region17
    $region16: #{tpu_custom_call.1} parent=1 // pred_region
      %s46 = ssub.s32 2048, 2048
      %47 = vsyncadd [#allocation6], %s46
      %s48 = sshll.u32 [#allocation7], 4
      %s49 = int_to_ptr.vmem [resolvable:$true] %s48
      %54 = dma.hbm_to_vmem [thread:$0]  %s3, 2048, %s49, [#allocation6], 128, 128, 8
    $region17: #{tpu_custom_call.1} parent=1 // pred_fallthru
      _
    // Predicated region
    $region18: #{tpu_custom_call.1} parent=1 // pred_check
      _
    $region19: #{tpu_custom_call.1} parent=1 // pred_check_branch
      %56 = sbr.rel (0) target = $region21
    $region20: #{tpu_custom_call.1} parent=1 // pred_region
      _
    $region21: #{tpu_custom_call.1} parent=1 // pred_fallthru
      _
    // Predicated region
    $region22: #{tpu_custom_call.1} parent=1 // pred_check
      _
    $region23: #{tpu_custom_call.1} parent=1 // pred_check_branch
      %58 = sbr.rel (0) target = $region25
    $region24: #{tpu_custom_call.1} parent=1 // pred_region
      %s60 = ssub.s32 2048, 2048
      %61 = vsyncadd [#allocation9], %s60
      %s62 = sshll.u32 [#allocation8], 4
      %s63 = int_to_ptr.vmem [resolvable:$true] %s62
      %68 = dma.hbm_to_vmem [thread:$0]  %s5, 2048, %s63, [#allocation9], 64, 64, 4
    $region25: #{tpu_custom_call.1} parent=1 // pred_fallthru
      _
    // Predicated region
    $region26: #{tpu_custom_call.1} parent=1 // pred_check
      _
    $region27: #{tpu_custom_call.1} parent=1 // pred_check_branch
      %70 = sbr.rel (0) target = $region29
    $region28: #{tpu_custom_call.1} parent=1 // pred_region
      _
    $region29: #{tpu_custom_call.1} parent=1 // pred_fallthru
      _
    // Predicated region
    $region30: #{tpu_custom_call.1} parent=1 // pred_check
      _
    $region31: #{tpu_custom_call.1} parent=1 // pred_check_branch
      %72 = sbr.rel (0) target = $region33
    $region32: #{tpu_custom_call.1} parent=1 // pred_region
      %73 = dma.done [#allocation3], 512
    $region33: #{tpu_custom_call.1} parent=1 // pred_fallthru
      _
    // Predicated region
    $region34: #{tpu_custom_call.1} parent=1 // pred_check
      _
    $region35: #{tpu_custom_call.1} parent=1 // pred_check_branch
      %75 = sbr.rel (0) target = $region37
    $region36: #{tpu_custom_call.1} parent=1 // pred_region
      %76 = dma.done [#allocation6], 8192
    $region37: #{tpu_custom_call.1} parent=1 // pred_fallthru
      _
    // Predicated region
    $region38: #{tpu_custom_call.1} parent=1 // pred_check
      _
    $region39: #{tpu_custom_call.1} parent=1 // pred_check_branch
      %78 = sbr.rel (0) target = $region41
    $region40: #{tpu_custom_call.1} parent=1 // pred_region
      %79 = dma.done [#allocation6], 2048
    $region41: #{tpu_custom_call.1} parent=1 // pred_fallthru
      _
    // Predicated region
    $region42: #{tpu_custom_call.1} parent=1 // pred_check
      _
    $region43: #{tpu_custom_call.1} parent=1 // pred_check_branch
      %81 = sbr.rel (0) target = $region45
    $region44: #{tpu_custom_call.1} parent=1 // pred_region
      %82 = dma.done [#allocation9], 2048
    $region45: #{tpu_custom_call.1} parent=1 // pred_fallthru
      _
    %v84 = vld [vmem:[#allocation2] sm:$0xff]
    %v85 = vld [vmem:[#allocation2 + $0x8] sm:$0xff]
    %v86 = vld [vmem:[#allocation2 + $0x10] sm:$0xff]
    %v87 = vld [vmem:[#allocation2 + $0x18] sm:$0xff]
    %v88 = vld [vmem:[#allocation5] sm:$0xf]
    %v89 = vld [vmem:[#allocation5 + $0x4] sm:$0xf]
    %v90 = vld [vmem:[#allocation5 + $0x8] sm:$0xf]
    %v91 = vld [vmem:[#allocation5 + $0xc] sm:$0xf]
    %v92 = vld [vmem:[#allocation5 + $0x10] sm:$0xf]
    %v93 = vld [vmem:[#allocation5 + $0x14] sm:$0xf]
    %v94 = vld [vmem:[#allocation5 + $0x18] sm:$0xf]
    %v95 = vld [vmem:[#allocation5 + $0x1c] sm:$0xf]
    %v96 = vld [vmem:[#allocation5 + $0x20] sm:$0xf]
    %v97 = vld [vmem:[#allocation5 + $0x24] sm:$0xf]
    %v98 = vld [vmem:[#allocation5 + $0x28] sm:$0xf]
    %v99 = vld [vmem:[#allocation5 + $0x2c] sm:$0xf]
    %v100 = vld [vmem:[#allocation5 + $0x30] sm:$0xf]
    %v101 = vld [vmem:[#allocation5 + $0x34] sm:$0xf]
    %v102 = vld [vmem:[#allocation5 + $0x38] sm:$0xf]
    %v103 = vld [vmem:[#allocation5 + $0x3c] sm:$0xf]
    %v104 = vld [vmem:[#allocation5 + $0x40] sm:$0xf]
    %v105 = vld [vmem:[#allocation5 + $0x44] sm:$0xf]
    %v106 = vld [vmem:[#allocation5 + $0x48] sm:$0xf]
    %v107 = vld [vmem:[#allocation5 + $0x4c] sm:$0xf]
    %v108 = vld [vmem:[#allocation5 + $0x50] sm:$0xf]
    %v109 = vld [vmem:[#allocation5 + $0x54] sm:$0xf]
    %v110 = vld [vmem:[#allocation5 + $0x58] sm:$0xf]
    %v111 = vld [vmem:[#allocation5 + $0x5c] sm:$0xf]
    %v112 = vld [vmem:[#allocation5 + $0x60] sm:$0xf]
    %v113 = vld [vmem:[#allocation5 + $0x64] sm:$0xf]
    %v114 = vld [vmem:[#allocation5 + $0x68] sm:$0xf]
    %v115 = vld [vmem:[#allocation5 + $0x6c] sm:$0xf]
    %v116 = vld [vmem:[#allocation5 + $0x70] sm:$0xf]
    %v117 = vld [vmem:[#allocation5 + $0x74] sm:$0xf]
    %v118 = vld [vmem:[#allocation5 + $0x78] sm:$0xf]
    %v119 = vld [vmem:[#allocation5 + $0x7c] sm:$0xf]
    %v120 = vld [vmem:[#allocation5 + $0x80] sm:$0xf]
    %v121 = vld [vmem:[#allocation5 + $0x84] sm:$0xf]
    %v122 = vld [vmem:[#allocation5 + $0x88] sm:$0xf]
    %v123 = vld [vmem:[#allocation5 + $0x8c] sm:$0xf]
    %v124 = vld [vmem:[#allocation5 + $0x90] sm:$0xf]
    %v125 = vld [vmem:[#allocation5 + $0x94] sm:$0xf]
    %v126 = vld [vmem:[#allocation5 + $0x98] sm:$0xf]
    %v127 = vld [vmem:[#allocation5 + $0x9c] sm:$0xf]
    %v128 = vld [vmem:[#allocation5 + $0xa0] sm:$0xf]
    %v129 = vld [vmem:[#allocation5 + $0xa4] sm:$0xf]
    %v130 = vld [vmem:[#allocation5 + $0xa8] sm:$0xf]
    %v131 = vld [vmem:[#allocation5 + $0xac] sm:$0xf]
    %v132 = vld [vmem:[#allocation5 + $0xb0] sm:$0xf]
    %v133 = vld [vmem:[#allocation5 + $0xb4] sm:$0xf]
    %v134 = vld [vmem:[#allocation5 + $0xb8] sm:$0xf]
    %v135 = vld [vmem:[#allocation5 + $0xbc] sm:$0xf]
    %v136 = vld [vmem:[#allocation5 + $0xc0] sm:$0xf]
    %v137 = vld [vmem:[#allocation5 + $0xc4] sm:$0xf]
    %v138 = vld [vmem:[#allocation5 + $0xc8] sm:$0xf]
    %v139 = vld [vmem:[#allocation5 + $0xcc] sm:$0xf]
    %v140 = vld [vmem:[#allocation5 + $0xd0] sm:$0xf]
    %v141 = vld [vmem:[#allocation5 + $0xd4] sm:$0xf]
    %v142 = vld [vmem:[#allocation5 + $0xd8] sm:$0xf]
    %v143 = vld [vmem:[#allocation5 + $0xdc] sm:$0xf]
    %v144 = vld [vmem:[#allocation5 + $0xe0] sm:$0xf]
    %v145 = vld [vmem:[#allocation5 + $0xe4] sm:$0xf]
    %v146 = vld [vmem:[#allocation5 + $0xe8] sm:$0xf]
    %v147 = vld [vmem:[#allocation5 + $0xec] sm:$0xf]
    %v148 = vld [vmem:[#allocation5 + $0xf0] sm:$0xf]
    %v149 = vld [vmem:[#allocation5 + $0xf4] sm:$0xf]
    %v150 = vld [vmem:[#allocation5 + $0xf8] sm:$0xf]
    %v151 = vld [vmem:[#allocation5 + $0xfc] sm:$0xf]
    %v152 = vld [vmem:[#allocation5 + $0x100] sm:$0xf]
    %v153 = vld [vmem:[#allocation5 + $0x104] sm:$0xf]
    %v154 = vld [vmem:[#allocation5 + $0x108] sm:$0xf]
    %v155 = vld [vmem:[#allocation5 + $0x10c] sm:$0xf]
    %v156 = vld [vmem:[#allocation5 + $0x110] sm:$0xf]
    %v157 = vld [vmem:[#allocation5 + $0x114] sm:$0xf]
    %v158 = vld [vmem:[#allocation5 + $0x118] sm:$0xf]
    %v159 = vld [vmem:[#allocation5 + $0x11c] sm:$0xf]
    %v160 = vld [vmem:[#allocation5 + $0x120] sm:$0xf]
    %v161 = vld [vmem:[#allocation5 + $0x124] sm:$0xf]
    %v162 = vld [vmem:[#allocation5 + $0x128] sm:$0xf]
    %v163 = vld [vmem:[#allocation5 + $0x12c] sm:$0xf]
    %v164 = vld [vmem:[#allocation5 + $0x130] sm:$0xf]
    %v165 = vld [vmem:[#allocation5 + $0x134] sm:$0xf]
    %v166 = vld [vmem:[#allocation5 + $0x138] sm:$0xf]
    %v167 = vld [vmem:[#allocation5 + $0x13c] sm:$0xf]
    %v168 = vld [vmem:[#allocation5 + $0x140] sm:$0xf]
    %v169 = vld [vmem:[#allocation5 + $0x144] sm:$0xf]
    %v170 = vld [vmem:[#allocation5 + $0x148] sm:$0xf]
    %v171 = vld [vmem:[#allocation5 + $0x14c] sm:$0xf]
    %v172 = vld [vmem:[#allocation5 + $0x150] sm:$0xf]
    %v173 = vld [vmem:[#allocation5 + $0x154] sm:$0xf]
    %v174 = vld [vmem:[#allocation5 + $0x158] sm:$0xf]
    %v175 = vld [vmem:[#allocation5 + $0x15c] sm:$0xf]
    %v176 = vld [vmem:[#allocation5 + $0x160] sm:$0xf]
    %v177 = vld [vmem:[#allocation5 + $0x164] sm:$0xf]
    %v178 = vld [vmem:[#allocation5 + $0x168] sm:$0xf]
    %v179 = vld [vmem:[#allocation5 + $0x16c] sm:$0xf]
    %v180 = vld [vmem:[#allocation5 + $0x170] sm:$0xf]
    %v181 = vld [vmem:[#allocation5 + $0x174] sm:$0xf]
    %v182 = vld [vmem:[#allocation5 + $0x178] sm:$0xf]
    %v183 = vld [vmem:[#allocation5 + $0x17c] sm:$0xf]
    %v184 = vld [vmem:[#allocation5 + $0x180] sm:$0xf]
    %v185 = vld [vmem:[#allocation5 + $0x184] sm:$0xf]
    %v186 = vld [vmem:[#allocation5 + $0x188] sm:$0xf]
    %v187 = vld [vmem:[#allocation5 + $0x18c] sm:$0xf]
    %v188 = vld [vmem:[#allocation5 + $0x190] sm:$0xf]
    %v189 = vld [vmem:[#allocation5 + $0x194] sm:$0xf]
    %v190 = vld [vmem:[#allocation5 + $0x198] sm:$0xf]
    %v191 = vld [vmem:[#allocation5 + $0x19c] sm:$0xf]
    %v192 = vld [vmem:[#allocation5 + $0x1a0] sm:$0xf]
    %v193 = vld [vmem:[#allocation5 + $0x1a4] sm:$0xf]
    %v194 = vld [vmem:[#allocation5 + $0x1a8] sm:$0xf]
    %v195 = vld [vmem:[#allocation5 + $0x1ac] sm:$0xf]
    %v196 = vld [vmem:[#allocation5 + $0x1b0] sm:$0xf]
    %v197 = vld [vmem:[#allocation5 + $0x1b4] sm:$0xf]
    %v198 = vld [vmem:[#allocation5 + $0x1b8] sm:$0xf]
    %v199 = vld [vmem:[#allocation5 + $0x1bc] sm:$0xf]
    %v200 = vld [vmem:[#allocation5 + $0x1c0] sm:$0xf]
    %v201 = vld [vmem:[#allocation5 + $0x1c4] sm:$0xf]
    %v202 = vld [vmem:[#allocation5 + $0x1c8] sm:$0xf]
    %v203 = vld [vmem:[#allocation5 + $0x1cc] sm:$0xf]
    %v204 = vld [vmem:[#allocation5 + $0x1d0] sm:$0xf]
    %v205 = vld [vmem:[#allocation5 + $0x1d4] sm:$0xf]
    %v206 = vld [vmem:[#allocation5 + $0x1d8] sm:$0xf]
    %v207 = vld [vmem:[#allocation5 + $0x1dc] sm:$0xf]
    %v208 = vld [vmem:[#allocation5 + $0x1e0] sm:$0xf]
    %v209 = vld [vmem:[#allocation5 + $0x1e4] sm:$0xf]
    %v210 = vld [vmem:[#allocation5 + $0x1e8] sm:$0xf]
    %v211 = vld [vmem:[#allocation5 + $0x1ec] sm:$0xf]
    %v212 = vld [vmem:[#allocation5 + $0x1f0] sm:$0xf]
    %v213 = vld [vmem:[#allocation5 + $0x1f4] sm:$0xf]
    %v214 = vld [vmem:[#allocation5 + $0x1f8] sm:$0xf]
    %v215 = vld [vmem:[#allocation5 + $0x1fc] sm:$0xf]
    %v216 = vld [vmem:[%s2] sm:$0x1]
    %v218 = vlaneseq
    %v219 = vshrl.u32 %v218, 7
    %v220 = vsub.s32 0, %v219
    %v221 = vrot.slane %v216, %v220
    %v227 = vunpack.c.l.b16 %v84
    %v228 = vunpack.c.h.b16 %v84
    %v229 = vunpack.c.l.b16 %v85
    %v230 = vunpack.c.h.b16 %v85
    %v231 = vunpack.c.l.b16 %v86
    %v232 = vunpack.c.h.b16 %v86
    %v233 = vunpack.c.l.b16 %v87
    %v234 = vunpack.c.h.b16 %v87
    %v235 = vpack.c.b16 %v227, %v227
    %v236 = vpack.c.b16 %v228, %v228
    %v237 = vpack.c.b16 %v229, %v229
    %v238 = vpack.c.b16 %v230, %v230
    %v239 = vpack.c.b16 %v231, %v231
    %v240 = vpack.c.b16 %v232, %v232
    %v241 = vpack.c.b16 %v233, %v233
    %v242 = vpack.c.b16 %v234, %v234
    %v379 = vunpack.c.l.b16 %v88
    %v380 = vunpack.c.l.b16 %v89
    %v381 = vunpack.c.l.b16 %v90
    %v382 = vunpack.c.l.b16 %v91
    %v383 = vunpack.c.l.b16 %v92
    %v384 = vunpack.c.l.b16 %v93
    %v385 = vunpack.c.l.b16 %v94
    %v386 = vunpack.c.l.b16 %v95
    %v387 = vunpack.c.l.b16 %v96
    %v388 = vunpack.c.l.b16 %v97
    %v389 = vunpack.c.l.b16 %v98
    %v390 = vunpack.c.l.b16 %v99
    %v391 = vunpack.c.l.b16 %v100
    %v392 = vunpack.c.l.b16 %v101
    %v393 = vunpack.c.l.b16 %v102
    %v394 = vunpack.c.l.b16 %v103
    %v395 = vunpack.c.l.b16 %v104
    %v396 = vunpack.c.l.b16 %v105
    %v397 = vunpack.c.l.b16 %v106
    %v398 = vunpack.c.l.b16 %v107
    %v399 = vunpack.c.l.b16 %v108
    %v400 = vunpack.c.l.b16 %v109
    %v401 = vunpack.c.l.b16 %v110
    %v402 = vunpack.c.l.b16 %v111
    %v403 = vunpack.c.l.b16 %v112
    %v404 = vunpack.c.l.b16 %v113
    %v405 = vunpack.c.l.b16 %v114
    %v406 = vunpack.c.l.b16 %v115
    %v407 = vunpack.c.l.b16 %v116
    %v408 = vunpack.c.l.b16 %v117
    %v409 = vunpack.c.l.b16 %v118
    %v410 = vunpack.c.l.b16 %v119
    %v411 = vunpack.c.l.b16 %v120
    %v412 = vunpack.c.l.b16 %v121
    %v413 = vunpack.c.l.b16 %v122
    %v414 = vunpack.c.l.b16 %v123
    %v415 = vunpack.c.l.b16 %v124
    %v416 = vunpack.c.l.b16 %v125
    %v417 = vunpack.c.l.b16 %v126
    %v418 = vunpack.c.l.b16 %v127
    %v419 = vunpack.c.l.b16 %v128
    %v420 = vunpack.c.l.b16 %v129
    %v421 = vunpack.c.l.b16 %v130
    %v422 = vunpack.c.l.b16 %v131
    %v423 = vunpack.c.l.b16 %v132
    %v424 = vunpack.c.l.b16 %v133
    %v425 = vunpack.c.l.b16 %v134
    %v426 = vunpack.c.l.b16 %v135
    %v427 = vunpack.c.l.b16 %v136
    %v428 = vunpack.c.l.b16 %v137
    %v429 = vunpack.c.l.b16 %v138
    %v430 = vunpack.c.l.b16 %v139
    %v431 = vunpack.c.l.b16 %v140
    %v432 = vunpack.c.l.b16 %v141
    %v433 = vunpack.c.l.b16 %v142
    %v434 = vunpack.c.l.b16 %v143
    %v435 = vunpack.c.l.b16 %v144
    %v436 = vunpack.c.l.b16 %v145
    %v437 = vunpack.c.l.b16 %v146
    %v438 = vunpack.c.l.b16 %v147
    %v439 = vunpack.c.l.b16 %v148
    %v440 = vunpack.c.l.b16 %v149
    %v441 = vunpack.c.l.b16 %v150
    %v442 = vunpack.c.l.b16 %v151
    %v443 = vunpack.c.l.b16 %v152
    %v444 = vunpack.c.l.b16 %v153
    %v445 = vunpack.c.l.b16 %v154
    %v446 = vunpack.c.l.b16 %v155
    %v447 = vunpack.c.l.b16 %v156
    %v448 = vunpack.c.l.b16 %v157
    %v449 = vunpack.c.l.b16 %v158
    %v450 = vunpack.c.l.b16 %v159
    %v451 = vunpack.c.l.b16 %v160
    %v452 = vunpack.c.l.b16 %v161
    %v453 = vunpack.c.l.b16 %v162
    %v454 = vunpack.c.l.b16 %v163
    %v455 = vunpack.c.l.b16 %v164
    %v456 = vunpack.c.l.b16 %v165
    %v457 = vunpack.c.l.b16 %v166
    %v458 = vunpack.c.l.b16 %v167
    %v459 = vunpack.c.l.b16 %v168
    %v460 = vunpack.c.l.b16 %v169
    %v461 = vunpack.c.l.b16 %v170
    %v462 = vunpack.c.l.b16 %v171
    %v463 = vunpack.c.l.b16 %v172
    %v464 = vunpack.c.l.b16 %v173
    %v465 = vunpack.c.l.b16 %v174
    %v466 = vunpack.c.l.b16 %v175
    %v467 = vunpack.c.l.b16 %v176
    %v468 = vunpack.c.l.b16 %v177
    %v469 = vunpack.c.l.b16 %v178
    %v470 = vunpack.c.l.b16 %v179
    %v471 = vunpack.c.l.b16 %v180
    %v472 = vunpack.c.l.b16 %v181
    %v473 = vunpack.c.l.b16 %v182
    %v474 = vunpack.c.l.b16 %v183
    %v475 = vunpack.c.l.b16 %v184
    %v476 = vunpack.c.l.b16 %v185
    %v477 = vunpack.c.l.b16 %v186
    %v478 = vunpack.c.l.b16 %v187
    %v479 = vunpack.c.l.b16 %v188
    %v480 = vunpack.c.l.b16 %v189
    %v481 = vunpack.c.l.b16 %v190
    %v482 = vunpack.c.l.b16 %v191
    %v483 = vunpack.c.l.b16 %v192
    %v484 = vunpack.c.l.b16 %v193
    %v485 = vunpack.c.l.b16 %v194
    %v486 = vunpack.c.l.b16 %v195
    %v487 = vunpack.c.l.b16 %v196
    %v488 = vunpack.c.l.b16 %v197
    %v489 = vunpack.c.l.b16 %v198
    %v490 = vunpack.c.l.b16 %v199
    %v491 = vunpack.c.l.b16 %v200
    %v492 = vunpack.c.l.b16 %v201
    %v493 = vunpack.c.l.b16 %v202
    %v494 = vunpack.c.l.b16 %v203
    %v495 = vunpack.c.l.b16 %v204
    %v496 = vunpack.c.l.b16 %v205
    %v497 = vunpack.c.l.b16 %v206
    %v498 = vunpack.c.l.b16 %v207
    %v499 = vunpack.c.l.b16 %v208
    %v500 = vunpack.c.l.b16 %v209
    %v501 = vunpack.c.l.b16 %v210
    %v502 = vunpack.c.l.b16 %v211
    %v503 = vunpack.c.l.b16 %v212
    %v504 = vunpack.c.l.b16 %v213
    %v505 = vunpack.c.l.b16 %v214
    %v506 = vunpack.c.l.b16 %v215
    %v507 = vpack.c.b16 %v380, %v379
    %v508 = vpack.c.b16 %v382, %v381
    %v509 = vpack.c.b16 %v384, %v383
    %v510 = vpack.c.b16 %v386, %v385
    %v511 = vpack.c.b16 %v388, %v387
    %v512 = vpack.c.b16 %v390, %v389
    %v513 = vpack.c.b16 %v392, %v391
    %v514 = vpack.c.b16 %v394, %v393
    %v515 = vpack.c.b16 %v396, %v395
    %v516 = vpack.c.b16 %v398, %v397
    %v517 = vpack.c.b16 %v400, %v399
    %v518 = vpack.c.b16 %v402, %v401
    %v519 = vpack.c.b16 %v404, %v403
    %v520 = vpack.c.b16 %v406, %v405
    %v521 = vpack.c.b16 %v408, %v407
    %v522 = vpack.c.b16 %v410, %v409
    %v523 = vpack.c.b16 %v412, %v411
    %v524 = vpack.c.b16 %v414, %v413
    %v525 = vpack.c.b16 %v416, %v415
    %v526 = vpack.c.b16 %v418, %v417
    %v527 = vpack.c.b16 %v420, %v419
    %v528 = vpack.c.b16 %v422, %v421
    %v529 = vpack.c.b16 %v424, %v423
    %v530 = vpack.c.b16 %v426, %v425
    %v531 = vpack.c.b16 %v428, %v427
    %v532 = vpack.c.b16 %v430, %v429
    %v533 = vpack.c.b16 %v432, %v431
    %v534 = vpack.c.b16 %v434, %v433
    %v535 = vpack.c.b16 %v436, %v435
    %v536 = vpack.c.b16 %v438, %v437
    %v537 = vpack.c.b16 %v440, %v439
    %v538 = vpack.c.b16 %v442, %v441
    %v539 = vpack.c.b16 %v444, %v443
    %v540 = vpack.c.b16 %v446, %v445
    %v541 = vpack.c.b16 %v448, %v447
    %v542 = vpack.c.b16 %v450, %v449
    %v543 = vpack.c.b16 %v452, %v451
    %v544 = vpack.c.b16 %v454, %v453
    %v545 = vpack.c.b16 %v456, %v455
    %v546 = vpack.c.b16 %v458, %v457
    %v547 = vpack.c.b16 %v460, %v459
    %v548 = vpack.c.b16 %v462, %v461
    %v549 = vpack.c.b16 %v464, %v463
    %v550 = vpack.c.b16 %v466, %v465
    %v551 = vpack.c.b16 %v468, %v467
    %v552 = vpack.c.b16 %v470, %v469
    %v553 = vpack.c.b16 %v472, %v471
    %v554 = vpack.c.b16 %v474, %v473
    %v555 = vpack.c.b16 %v476, %v475
    %v556 = vpack.c.b16 %v478, %v477
    %v557 = vpack.c.b16 %v480, %v479
    %v558 = vpack.c.b16 %v482, %v481
    %v559 = vpack.c.b16 %v484, %v483
    %v560 = vpack.c.b16 %v486, %v485
    %v561 = vpack.c.b16 %v488, %v487
    %v562 = vpack.c.b16 %v490, %v489
    %v563 = vpack.c.b16 %v492, %v491
    %v564 = vpack.c.b16 %v494, %v493
    %v565 = vpack.c.b16 %v496, %v495
    %v566 = vpack.c.b16 %v498, %v497
    %v567 = vpack.c.b16 %v500, %v499
    %v568 = vpack.c.b16 %v502, %v501
    %v569 = vpack.c.b16 %v504, %v503
    %v570 = vpack.c.b16 %v506, %v505
    %635 = vmatprep.subr.bf16.mxu0 0
    %636 = vmatpush1.bf16.msra.mxu0 %v507
    %637 = vmatprep.subr.bf16.mxu0 0
    %638 = vmatpush1.bf16.msra.mxu0 %v508
    %639 = vmatprep.subr.bf16.mxu0 0
    %640 = vmatpush1.bf16.msra.mxu0 %v509
    %641 = vmatprep.subr.bf16.mxu0 0
    %642 = vmatpush1.bf16.msra.mxu0 %v510
    %643 = vmatprep.subr.bf16.mxu0 0
    %644 = vmatpush1.bf16.msra.mxu0 %v511
    %645 = vmatprep.subr.bf16.mxu0 0
    %646 = vmatpush1.bf16.msra.mxu0 %v512
    %647 = vmatprep.subr.bf16.mxu0 0
    %648 = vmatpush1.bf16.msra.mxu0 %v513
    %649 = vmatprep.subr.bf16.mxu0 0
    %650 = vmatpush1.bf16.msra.mxu0 %v514
    %651 = vmatprep.subr.bf16.mxu0 0
    %652 = vmatpush1.bf16.msra.mxu0 %v515
    %653 = vmatprep.subr.bf16.mxu0 0
    %654 = vmatpush1.bf16.msra.mxu0 %v516
    %655 = vmatprep.subr.bf16.mxu0 0
    %656 = vmatpush1.bf16.msra.mxu0 %v517
    %657 = vmatprep.subr.bf16.mxu0 0
    %658 = vmatpush1.bf16.msra.mxu0 %v518
    %659 = vmatprep.subr.bf16.mxu0 0
    %660 = vmatpush1.bf16.msra.mxu0 %v519
    %661 = vmatprep.subr.bf16.mxu0 0
    %662 = vmatpush1.bf16.msra.mxu0 %v520
    %663 = vmatprep.subr.bf16.mxu0 0
    %664 = vmatpush1.bf16.msra.mxu0 %v521
    %665 = vmatprep.subr.bf16.mxu0 0
    %666 = vmatpush1.bf16.msra.mxu0 %v522
    %667 = vmatprep.mubr.bf16.mxu0 %v236
    %668 = vmatmul.mubr.bf16.gmra.mrb[0].mxu0 %v235
    %v669 = vpop.f32.mrb[0].mxu0
    %v670 = vadd.f32 %v221, %v669
    %v671 = vpop.f32.mrb[0].mxu0
    %v672 = vpop.f32.mrb[0].mxu0
    %v673 = vpop.f32.mrb[0].mxu0
    %674 = vdwg.mxu0
    %675 = vmatprep.subr.bf16.mxu0 0
    %676 = vmatpush1.bf16.msra.mxu0 %v523
    %677 = vmatprep.subr.bf16.mxu0 0
    %678 = vmatpush1.bf16.msra.mxu0 %v524
    %679 = vmatprep.subr.bf16.mxu0 0
    %680 = vmatpush1.bf16.msra.mxu0 %v525
    %681 = vmatprep.subr.bf16.mxu0 0
    %682 = vmatpush1.bf16.msra.mxu0 %v526
    %683 = vmatprep.subr.bf16.mxu0 0
    %684 = vmatpush1.bf16.msra.mxu0 %v527
    %685 = vmatprep.subr.bf16.mxu0 0
    %686 = vmatpush1.bf16.msra.mxu0 %v528
    %687 = vmatprep.subr.bf16.mxu0 0
    %688 = vmatpush1.bf16.msra.mxu0 %v529
    %689 = vmatprep.subr.bf16.mxu0 0
    %690 = vmatpush1.bf16.msra.mxu0 %v530
    %691 = vmatprep.subr.bf16.mxu0 0
    %692 = vmatpush1.bf16.msra.mxu0 %v531
    %693 = vmatprep.subr.bf16.mxu0 0
    %694 = vmatpush1.bf16.msra.mxu0 %v532
    %695 = vmatprep.subr.bf16.mxu0 0
    %696 = vmatpush1.bf16.msra.mxu0 %v533
    %697 = vmatprep.subr.bf16.mxu0 0
    %698 = vmatpush1.bf16.msra.mxu0 %v534
    %699 = vmatprep.subr.bf16.mxu0 0
    %700 = vmatpush1.bf16.msra.mxu0 %v535
    %701 = vmatprep.subr.bf16.mxu0 0
    %702 = vmatpush1.bf16.msra.mxu0 %v536
    %703 = vmatprep.subr.bf16.mxu0 0
    %704 = vmatpush1.bf16.msra.mxu0 %v537
    %705 = vmatprep.subr.bf16.mxu0 0
    %706 = vmatpush1.bf16.msra.mxu0 %v538
    %707 = vmatprep.mubr.bf16.mxu0 %v238
    %708 = vmatmul.mubr.bf16.gmra.mrb[0].mxu0 %v237
    %v709 = vpop.f32.mrb[0].mxu0
    %v710 = vadd.f32 %v670, %v709
    %v711 = vpop.f32.mrb[0].mxu0
    %v712 = vpop.f32.mrb[0].mxu0
    %v713 = vpop.f32.mrb[0].mxu0
    %714 = vdwg.mxu0
    %715 = vmatprep.subr.bf16.mxu0 0
    %716 = vmatpush1.bf16.msra.mxu0 %v539
    %717 = vmatprep.subr.bf16.mxu0 0
    %718 = vmatpush1.bf16.msra.mxu0 %v540
    %719 = vmatprep.subr.bf16.mxu0 0
    %720 = vmatpush1.bf16.msra.mxu0 %v541
    %721 = vmatprep.subr.bf16.mxu0 0
    %722 = vmatpush1.bf16.msra.mxu0 %v542
    %723 = vmatprep.subr.bf16.mxu0 0
    %724 = vmatpush1.bf16.msra.mxu0 %v543
    %725 = vmatprep.subr.bf16.mxu0 0
    %726 = vmatpush1.bf16.msra.mxu0 %v544
    %727 = vmatprep.subr.bf16.mxu0 0
    %728 = vmatpush1.bf16.msra.mxu0 %v545
    %729 = vmatprep.subr.bf16.mxu0 0
    %730 = vmatpush1.bf16.msra.mxu0 %v546
    %731 = vmatprep.subr.bf16.mxu0 0
    %732 = vmatpush1.bf16.msra.mxu0 %v547
    %733 = vmatprep.subr.bf16.mxu0 0
    %734 = vmatpush1.bf16.msra.mxu0 %v548
    %735 = vmatprep.subr.bf16.mxu0 0
    %736 = vmatpush1.bf16.msra.mxu0 %v549
    %737 = vmatprep.subr.bf16.mxu0 0
    %738 = vmatpush1.bf16.msra.mxu0 %v550
    %739 = vmatprep.subr.bf16.mxu0 0
    %740 = vmatpush1.bf16.msra.mxu0 %v551
    %741 = vmatprep.subr.bf16.mxu0 0
    %742 = vmatpush1.bf16.msra.mxu0 %v552
    %743 = vmatprep.subr.bf16.mxu0 0
    %744 = vmatpush1.bf16.msra.mxu0 %v553
    %745 = vmatprep.subr.bf16.mxu0 0
    %746 = vmatpush1.bf16.msra.mxu0 %v554
    %747 = vmatprep.mubr.bf16.mxu0 %v240
    %748 = vmatmul.mubr.bf16.gmra.mrb[0].mxu0 %v239
    %v749 = vpop.f32.mrb[0].mxu0
    %v750 = vadd.f32 %v710, %v749
    %v751 = vpop.f32.mrb[0].mxu0
    %v752 = vpop.f32.mrb[0].mxu0
    %v753 = vpop.f32.mrb[0].mxu0
    %754 = vdwg.mxu0
    %755 = vmatprep.subr.bf16.mxu0 0
    %756 = vmatpush1.bf16.msra.mxu0 %v555
    %757 = vmatprep.subr.bf16.mxu0 0
    %758 = vmatpush1.bf16.msra.mxu0 %v556
    %759 = vmatprep.subr.bf16.mxu0 0
    %760 = vmatpush1.bf16.msra.mxu0 %v557
    %761 = vmatprep.subr.bf16.mxu0 0
    %762 = vmatpush1.bf16.msra.mxu0 %v558
    %763 = vmatprep.subr.bf16.mxu0 0
    %764 = vmatpush1.bf16.msra.mxu0 %v559
    %765 = vmatprep.subr.bf16.mxu0 0
    %766 = vmatpush1.bf16.msra.mxu0 %v560
    %767 = vmatprep.subr.bf16.mxu0 0
    %768 = vmatpush1.bf16.msra.mxu0 %v561
    %769 = vmatprep.subr.bf16.mxu0 0
    %770 = vmatpush1.bf16.msra.mxu0 %v562
    %771 = vmatprep.subr.bf16.mxu0 0
    %772 = vmatpush1.bf16.msra.mxu0 %v563
    %773 = vmatprep.subr.bf16.mxu0 0
    %774 = vmatpush1.bf16.msra.mxu0 %v564
    %775 = vmatprep.subr.bf16.mxu0 0
    %776 = vmatpush1.bf16.msra.mxu0 %v565
    %777 = vmatprep.subr.bf16.mxu0 0
    %778 = vmatpush1.bf16.msra.mxu0 %v566
    %779 = vmatprep.subr.bf16.mxu0 0
    %780 = vmatpush1.bf16.msra.mxu0 %v567
    %781 = vmatprep.subr.bf16.mxu0 0
    %782 = vmatpush1.bf16.msra.mxu0 %v568
    %783 = vmatprep.subr.bf16.mxu0 0
    %784 = vmatpush1.bf16.msra.mxu0 %v569
    %785 = vmatprep.subr.bf16.mxu0 0
    %786 = vmatpush1.bf16.msra.mxu0 %v570
    %787 = vmatprep.mubr.bf16.mxu0 %v242
    %788 = vmatmul.mubr.bf16.gmra.mrb[0].mxu0 %v241
    %v789 = vpop.f32.mrb[0].mxu0
    %v790 = vadd.f32 %v750, %v789
    %v791 = vpop.f32.mrb[0].mxu0
    %v792 = vpop.f32.mrb[0].mxu0
    %v793 = vpop.f32.mrb[0].mxu0
    %794 = vdwg.mxu0
    %v795 = vmax.f32 %v790, 0.0
    %v796 = vpack.c.bf16 %v795, %v795
    %v797 = vld [vmem:[#allocation7] sm:$0xff]
    %v798 = vld [vmem:[#allocation7 + $0x8] sm:$0xff]
    %v799 = vld [vmem:[#allocation7 + $0x10] sm:$0xff]
    %v800 = vld [vmem:[#allocation7 + $0x18] sm:$0xff]
    %v801 = vld [vmem:[#allocation7 + $0x20] sm:$0xff]
    %v802 = vld [vmem:[#allocation7 + $0x28] sm:$0xff]
    %v803 = vld [vmem:[#allocation7 + $0x30] sm:$0xff]
    %v804 = vld [vmem:[#allocation7 + $0x38] sm:$0xff]
    %v805 = vld [vmem:[#allocation7 + $0x40] sm:$0xff]
    %v806 = vld [vmem:[#allocation7 + $0x48] sm:$0xff]
    %v807 = vld [vmem:[#allocation7 + $0x50] sm:$0xff]
    %v808 = vld [vmem:[#allocation7 + $0x58] sm:$0xff]
    %v809 = vld [vmem:[#allocation7 + $0x60] sm:$0xff]
    %v810 = vld [vmem:[#allocation7 + $0x68] sm:$0xff]
    %v811 = vld [vmem:[#allocation7 + $0x70] sm:$0xff]
    %v812 = vld [vmem:[#allocation7 + $0x78] sm:$0xff]
    %v813 = vld [vmem:[%s4] sm:$0x3]
    %v815 = vlaneseq
    %v816 = vshrl.u32 %v815, 7
    %v817 = vsub.s32 0, %v816
    %v818 = vrot.slane %v813, %v817
    %v819 = vlaneseq
    %v820 = vshrl.u32 %v819, 7
    %v821 = vsub.s32 1, %v820
    %v822 = vrot.slane %v813, %v821
    %v841 = vunpack.c.l.b16 %v797
    %v842 = vunpack.c.h.b16 %v797
    %v843 = vunpack.c.l.b16 %v798
    %v844 = vunpack.c.h.b16 %v798
    %v845 = vunpack.c.l.b16 %v799
    %v846 = vunpack.c.h.b16 %v799
    %v847 = vunpack.c.l.b16 %v800
    %v848 = vunpack.c.h.b16 %v800
    %v849 = vunpack.c.l.b16 %v801
    %v850 = vunpack.c.h.b16 %v801
    %v851 = vunpack.c.l.b16 %v802
    %v852 = vunpack.c.h.b16 %v802
    %v853 = vunpack.c.l.b16 %v803
    %v854 = vunpack.c.h.b16 %v803
    %v855 = vunpack.c.l.b16 %v804
    %v856 = vunpack.c.h.b16 %v804
    %v857 = vunpack.c.l.b16 %v805
    %v858 = vunpack.c.h.b16 %v805
    %v859 = vunpack.c.l.b16 %v806
    %v860 = vunpack.c.h.b16 %v806
    %v861 = vunpack.c.l.b16 %v807
    %v862 = vunpack.c.h.b16 %v807
    %v863 = vunpack.c.l.b16 %v808
    %v864 = vunpack.c.h.b16 %v808
    %v865 = vunpack.c.l.b16 %v809
    %v866 = vunpack.c.h.b16 %v809
    %v867 = vunpack.c.l.b16 %v810
    %v868 = vunpack.c.h.b16 %v810
    %v869 = vunpack.c.l.b16 %v811
    %v870 = vunpack.c.h.b16 %v811
    %v871 = vunpack.c.l.b16 %v812
    %v872 = vunpack.c.h.b16 %v812
    %v873 = vpack.c.b16 %v843, %v841
    %v874 = vpack.c.b16 %v844, %v842
    %v875 = vpack.c.b16 %v847, %v845
    %v876 = vpack.c.b16 %v848, %v846
    %v877 = vpack.c.b16 %v851, %v849
    %v878 = vpack.c.b16 %v852, %v850
    %v879 = vpack.c.b16 %v855, %v853
    %v880 = vpack.c.b16 %v856, %v854
    %v881 = vpack.c.b16 %v859, %v857
    %v882 = vpack.c.b16 %v860, %v858
    %v883 = vpack.c.b16 %v863, %v861
    %v884 = vpack.c.b16 %v864, %v862
    %v885 = vpack.c.b16 %v867, %v865
    %v886 = vpack.c.b16 %v868, %v866
    %v887 = vpack.c.b16 %v871, %v869
    %v888 = vpack.c.b16 %v872, %v870
    %905 = vmatprep.subr.bf16.mxu0 %v874
    %906 = vmatpush1.bf16.msra.mxu0 %v873
    %907 = vmatprep.subr.bf16.mxu0 %v876
    %908 = vmatpush1.bf16.msra.mxu0 %v875
    %909 = vmatprep.subr.bf16.mxu0 %v878
    %910 = vmatpush1.bf16.msra.mxu0 %v877
    %911 = vmatprep.subr.bf16.mxu0 %v880
    %912 = vmatpush1.bf16.msra.mxu0 %v879
    %913 = vmatprep.subr.bf16.mxu0 %v882
    %914 = vmatpush1.bf16.msra.mxu0 %v881
    %915 = vmatprep.subr.bf16.mxu0 %v884
    %916 = vmatpush1.bf16.msra.mxu0 %v883
    %917 = vmatprep.subr.bf16.mxu0 %v886
    %918 = vmatpush1.bf16.msra.mxu0 %v885
    %919 = vmatprep.subr.bf16.mxu0 %v888
    %920 = vmatpush1.bf16.msra.mxu0 %v887
    %921 = vmatprep.subr.bf16.mxu0 0
    %922 = vmatpush1.bf16.msra.mxu0 0
    %923 = vmatprep.subr.bf16.mxu0 0
    %924 = vmatpush1.bf16.msra.mxu0 0
    %925 = vmatprep.subr.bf16.mxu0 0
    %926 = vmatpush1.bf16.msra.mxu0 0
    %927 = vmatprep.subr.bf16.mxu0 0
    %928 = vmatpush1.bf16.msra.mxu0 0
    %929 = vmatprep.subr.bf16.mxu0 0
    %930 = vmatpush1.bf16.msra.mxu0 0
    %931 = vmatprep.subr.bf16.mxu0 0
    %932 = vmatpush1.bf16.msra.mxu0 0
    %933 = vmatprep.subr.bf16.mxu0 0
    %934 = vmatpush1.bf16.msra.mxu0 0
    %935 = vmatprep.subr.bf16.mxu0 0
    %936 = vmatpush1.bf16.msra.mxu0 0
    %937 = vmatprep.mubr.bf16.mxu0 0
    %938 = vmatmul.mubr.bf16.gmra.mrb[0].mxu0 %v796
    %v939 = vpop.f32.mrb[0].mxu0
    %v940 = vadd.f32 %v818, %v939
    %v941 = vpop.f32.mrb[0].mxu0
    %v942 = vadd.f32 %v822, %v941
    %v943 = vpop.f32.mrb[0].mxu0
    %v944 = vpop.f32.mrb[0].mxu0
    %945 = vdwg.mxu0
    %v946 = vmul.f32 %v940, %v940
    %947 = vadd.xlane.f32.xlu0 %v946
    %v948 = vpop.xlane.xlu0 %947
    %v949 = vadd.f32 %v948, 1e-12
    %v950 = vrsqrt.pop %v949
    %v951 = vmul.f32 %v940, %v950
    %952 = vst [vmem:[#allocation10] sm:$0xff] %v951
    %v953 = vpack.c.bf16 %v940, %v940
    %v954 = vpack.c.bf16 %v942, %v942
    %v955 = vld [vmem:[#allocation8] sm:$0xf]
    %v956 = vld [vmem:[#allocation8 + $0x4] sm:$0xf]
    %v957 = vld [vmem:[#allocation8 + $0x8] sm:$0xf]
    %v958 = vld [vmem:[#allocation8 + $0xc] sm:$0xf]
    %v959 = vld [vmem:[#allocation8 + $0x10] sm:$0xf]
    %v960 = vld [vmem:[#allocation8 + $0x14] sm:$0xf]
    %v961 = vld [vmem:[#allocation8 + $0x18] sm:$0xf]
    %v962 = vld [vmem:[#allocation8 + $0x1c] sm:$0xf]
    %v963 = vld [vmem:[#allocation8 + $0x20] sm:$0xf]
    %v964 = vld [vmem:[#allocation8 + $0x24] sm:$0xf]
    %v965 = vld [vmem:[#allocation8 + $0x28] sm:$0xf]
    %v966 = vld [vmem:[#allocation8 + $0x2c] sm:$0xf]
    %v967 = vld [vmem:[#allocation8 + $0x30] sm:$0xf]
    %v968 = vld [vmem:[#allocation8 + $0x34] sm:$0xf]
    %v969 = vld [vmem:[#allocation8 + $0x38] sm:$0xf]
    %v970 = vld [vmem:[#allocation8 + $0x3c] sm:$0xf]
    %v971 = vld [vmem:[#allocation8 + $0x40] sm:$0xf]
    %v972 = vld [vmem:[#allocation8 + $0x44] sm:$0xf]
    %v973 = vld [vmem:[#allocation8 + $0x48] sm:$0xf]
    %v974 = vld [vmem:[#allocation8 + $0x4c] sm:$0xf]
    %v975 = vld [vmem:[#allocation8 + $0x50] sm:$0xf]
    %v976 = vld [vmem:[#allocation8 + $0x54] sm:$0xf]
    %v977 = vld [vmem:[#allocation8 + $0x58] sm:$0xf]
    %v978 = vld [vmem:[#allocation8 + $0x5c] sm:$0xf]
    %v979 = vld [vmem:[#allocation8 + $0x60] sm:$0xf]
    %v980 = vld [vmem:[#allocation8 + $0x64] sm:$0xf]
    %v981 = vld [vmem:[#allocation8 + $0x68] sm:$0xf]
    %v982 = vld [vmem:[#allocation8 + $0x6c] sm:$0xf]
    %v983 = vld [vmem:[#allocation8 + $0x70] sm:$0xf]
    %v984 = vld [vmem:[#allocation8 + $0x74] sm:$0xf]
    %v985 = vld [vmem:[#allocation8 + $0x78] sm:$0xf]
    %v986 = vld [vmem:[#allocation8 + $0x7c] sm:$0xf]
    %v987 = vld [vmem:[%s6] sm:$0x1]
    %v989 = vlaneseq
    %v990 = vshrl.u32 %v989, 7
    %v991 = vsub.s32 0, %v990
    %v992 = vrot.slane %v987, %v991
    %v1026 = vunpack.c.l.b16 %v955
    %v1027 = vunpack.c.l.b16 %v956
    %v1028 = vunpack.c.l.b16 %v957
    %v1029 = vunpack.c.l.b16 %v958
    %v1030 = vunpack.c.l.b16 %v959
    %v1031 = vunpack.c.l.b16 %v960
    %v1032 = vunpack.c.l.b16 %v961
    %v1033 = vunpack.c.l.b16 %v962
    %v1034 = vunpack.c.l.b16 %v963
    %v1035 = vunpack.c.l.b16 %v964
    %v1036 = vunpack.c.l.b16 %v965
    %v1037 = vunpack.c.l.b16 %v966
    %v1038 = vunpack.c.l.b16 %v967
    %v1039 = vunpack.c.l.b16 %v968
    %v1040 = vunpack.c.l.b16 %v969
    %v1041 = vunpack.c.l.b16 %v970
    %v1042 = vunpack.c.l.b16 %v971
    %v1043 = vunpack.c.l.b16 %v972
    %v1044 = vunpack.c.l.b16 %v973
    %v1045 = vunpack.c.l.b16 %v974
    %v1046 = vunpack.c.l.b16 %v975
    %v1047 = vunpack.c.l.b16 %v976
    %v1048 = vunpack.c.l.b16 %v977
    %v1049 = vunpack.c.l.b16 %v978
    %v1050 = vunpack.c.l.b16 %v979
    %v1051 = vunpack.c.l.b16 %v980
    %v1052 = vunpack.c.l.b16 %v981
    %v1053 = vunpack.c.l.b16 %v982
    %v1054 = vunpack.c.l.b16 %v983
    %v1055 = vunpack.c.l.b16 %v984
    %v1056 = vunpack.c.l.b16 %v985
    %v1057 = vunpack.c.l.b16 %v986
    %v1058 = vpack.c.b16 %v1027, %v1026
    %v1059 = vpack.c.b16 %v1029, %v1028
    %v1060 = vpack.c.b16 %v1031, %v1030
    %v1061 = vpack.c.b16 %v1033, %v1032
    %v1062 = vpack.c.b16 %v1035, %v1034
    %v1063 = vpack.c.b16 %v1037, %v1036
    %v1064 = vpack.c.b16 %v1039, %v1038
    %v1065 = vpack.c.b16 %v1041, %v1040
    %v1066 = vpack.c.b16 %v1043, %v1042
    %v1067 = vpack.c.b16 %v1045, %v1044
    %v1068 = vpack.c.b16 %v1047, %v1046
    %v1069 = vpack.c.b16 %v1049, %v1048
    %v1070 = vpack.c.b16 %v1051, %v1050
    %v1071 = vpack.c.b16 %v1053, %v1052
    %v1072 = vpack.c.b16 %v1055, %v1054
    %v1073 = vpack.c.b16 %v1057, %v1056
    %1090 = vmatprep.subr.bf16.mxu0 0
    %1091 = vmatpush1.bf16.msra.mxu0 %v1058
    %1092 = vmatprep.subr.bf16.mxu0 0
    %1093 = vmatpush1.bf16.msra.mxu0 %v1059
    %1094 = vmatprep.subr.bf16.mxu0 0
    %1095 = vmatpush1.bf16.msra.mxu0 %v1060
    %1096 = vmatprep.subr.bf16.mxu0 0
    %1097 = vmatpush1.bf16.msra.mxu0 %v1061
    %1098 = vmatprep.subr.bf16.mxu0 0
    %1099 = vmatpush1.bf16.msra.mxu0 %v1062
    %1100 = vmatprep.subr.bf16.mxu0 0
    %1101 = vmatpush1.bf16.msra.mxu0 %v1063
    %1102 = vmatprep.subr.bf16.mxu0 0
    %1103 = vmatpush1.bf16.msra.mxu0 %v1064
    %1104 = vmatprep.subr.bf16.mxu0 0
    %1105 = vmatpush1.bf16.msra.mxu0 %v1065
    %1106 = vmatprep.subr.bf16.mxu0 0
    %1107 = vmatpush1.bf16.msra.mxu0 %v1066
    %1108 = vmatprep.subr.bf16.mxu0 0
    %1109 = vmatpush1.bf16.msra.mxu0 %v1067
    %1110 = vmatprep.subr.bf16.mxu0 0
    %1111 = vmatpush1.bf16.msra.mxu0 %v1068
    %1112 = vmatprep.subr.bf16.mxu0 0
    %1113 = vmatpush1.bf16.msra.mxu0 %v1069
    %1114 = vmatprep.subr.bf16.mxu0 0
    %1115 = vmatpush1.bf16.msra.mxu0 %v1070
    %1116 = vmatprep.subr.bf16.mxu0 0
    %1117 = vmatpush1.bf16.msra.mxu0 %v1071
    %1118 = vmatprep.subr.bf16.mxu0 0
    %1119 = vmatpush1.bf16.msra.mxu0 %v1072
    %1120 = vmatprep.subr.bf16.mxu0 0
    %1121 = vmatpush1.bf16.msra.mxu0 %v1073
    %1122 = vmatprep.mubr.bf16.mxu0 %v954
    %1123 = vmatmul.mubr.bf16.gmra.mrb[0].mxu0 %v953
    %v1124 = vpop.f32.mrb[0].mxu0
    %v1125 = vadd.f32 %v992, %v1124
    %v1126 = vpop.f32.mrb[0].mxu0
    %v1127 = vpop.f32.mrb[0].mxu0
    %v1128 = vpop.f32.mrb[0].mxu0
    %1129 = vdwg.mxu0
    %1130 = vst [vmem:[#allocation11] sm:$0xff] %v1125
    // Predicated region
    $region46: #{tpu_custom_call.1} parent=1 // pred_check
      _
    $region47: #{tpu_custom_call.1} parent=1 // pred_check_branch
      %1132 = sbr.rel (0) target = $region49
    $region48: #{tpu_custom_call.1} parent=1 // pred_region
      %s1134 = ssub.s32 128, 128
      %1135 = vsyncadd [#allocation4], %s1134
      %s1137 = sshll.u32 [#allocation10], 4
      %s1138 = int_to_ptr.vmem [resolvable:$true] %s1137
      %1140 = dma.vmem_to_hbm [thread:$0]  %s1138, 128, %s7, [#allocation4]
    $region49: #{tpu_custom_call.1} parent=1 // pred_fallthru
      _
    // Predicated region
    $region50: #{tpu_custom_call.1} parent=1 // pred_check
      _
    $region51: #{tpu_custom_call.1} parent=1 // pred_check_branch
      %1142 = sbr.rel (0) target = $region53
    $region52: #{tpu_custom_call.1} parent=1 // pred_region
      %s1144 = ssub.s32 128, 128
      %1145 = vsyncadd [#allocation12], %s1144
      %s1147 = sshll.u32 [#allocation11], 4
      %s1148 = int_to_ptr.vmem [resolvable:$true] %s1147
      %1150 = dma.vmem_to_hbm [thread:$0]  %s1148, 128, %s8, [#allocation12]
    $region53: #{tpu_custom_call.1} parent=1 // pred_fallthru
      _
    // Predicated region
    $region54: #{tpu_custom_call.1} parent=1 // pred_check
      _
    $region55: #{tpu_custom_call.1} parent=1 // pred_check_branch
      %1152 = sbr.rel (0) target = $region57
    $region56: #{tpu_custom_call.1} parent=1 // pred_region
      %1153 = dma.done [#allocation4], 128
    $region57: #{tpu_custom_call.1} parent=1 // pred_fallthru
      _
    // Predicated region
    $region58: #{tpu_custom_call.1} parent=1 // pred_check
      _
    $region59: #{tpu_custom_call.1} parent=1 // pred_check_branch
      %1155 = sbr.rel (0) target = $region61
    $region60: #{tpu_custom_call.1} parent=1 // pred_region
      %1156 = dma.done [#allocation12], 128
    $region61: #{tpu_custom_call.1} parent=1 // pred_fallthru
      _
    %1157 = vsyncpa [#allocation3], 1
    %1158 = vsyncpa [#allocation6], 1
    %1159 = vsyncpa [#allocation9], 1
    %1160 = vsyncpa [#allocation4], 1
    %1161 = vsyncpa [#allocation12], 1

</llo_original>
